<compile_context>
chip_gen: v5e
topology: v5e:2x2
jax: 0.10.0
libtpu: 0.0.40
codegen_flags: <defaults>
</compile_context>

<pallas_src>
import math

import jax
import jax.numpy as jnp
from jax.experimental import pallas as pl
from jax.experimental.pallas import tpu as pltpu

_SQRT_2_OVER_PI = 0.7978845608028654  # sqrt(2/pi), matches torch GELU(tanh)


def _mlp_kernel(x_ref, wfc_ref, bfc_ref, wproj_ref, bproj_ref, o_ref, acc_ref):
    # grid = (M blocks "parallel", H blocks "arbitrary" = reduction)
    h_idx = pl.program_id(1)

    @pl.when(h_idx == 0)
    def _():
        acc_ref[...] = jnp.zeros_like(acc_ref)

    # First linear tile: (tm, E) @ (E, th) -> f32 accumulation, + f32 bias.
    h = jnp.dot(x_ref[...], wfc_ref[...], preferred_element_type=jnp.float32)
    h = h + bfc_ref[...]

    # GELU, tanh approximation (identical to F.gelu(approximate='tanh')).
    # Kept in f32 (EUP tanh is a separate bundle slot on all gens).
    g = 0.5 * h * (1.0 + jnp.tanh(_SQRT_2_OVER_PI * (h + 0.044715 * h * h * h)))

    # Partial second linear: (tm, th) @ (th, E) accumulated in f32 scratch.
    acc_ref[...] += jnp.dot(g.astype(wproj_ref.dtype), wproj_ref[...],
                            preferred_element_type=jnp.float32)

    @pl.when(h_idx == pl.num_programs(1) - 1)
    def _():
        o_ref[...] = (acc_ref[...] + bproj_ref[...]).astype(o_ref.dtype)


def _round_up(x, m):
    return ((x + m - 1) // m) * m


def _largest_divisor_tile(total, pref, align):
    """Largest divisor of `total` that is <= pref and a multiple of `align`
    (falls back to `total` itself for small / awkward dims)."""
    if total <= pref:
        return total
    t = (pref // align) * align
    while t >= align:
        if total % t == 0:
            return t
        t -= align
    return total


def prepare_mlp_params(c_fc_weight, c_fc_bias, c_proj_weight, c_proj_bias,
                       compute_dtype=jnp.bfloat16):
    """One-time weight prep (hoisted out of the forward path).

    Takes PyTorch nn.Linear layouts:
      c_fc_weight [4E, E], c_fc_bias [4E], c_proj_weight [E, 4E], c_proj_bias [E]
    Returns pre-transposed, pre-cast arrays for the kernel:
      wfc (E, 4E) compute_dtype, bfc (1, 4E) f32,
      wproj (4E, E) compute_dtype, bproj (1, E) f32.
    """
    wfc = jnp.asarray(c_fc_weight).T.astype(compute_dtype)
    bfc = jnp.asarray(c_fc_bias).reshape(1, -1).astype(jnp.float32)
    wproj = jnp.asarray(c_proj_weight).T.astype(compute_dtype)
    bproj = jnp.asarray(c_proj_bias).reshape(1, -1).astype(jnp.float32)
    return wfc, bfc, wproj, bproj


def mlp_forward(x, wfc, bfc, wproj, bproj, *, tm=None, th=None,
                vmem_budget_bytes=40 * 1024 * 1024):
    """x: [..., E]; weights as produced by `prepare_mlp_params`.
    Returns same shape/dtype as x."""
    orig_shape = x.shape
    E = orig_shape[-1]
    H = wfc.shape[1]
    assert wfc.shape == (E, H) and wproj.shape == (H, E)
    M = math.prod(orig_shape[:-1])

    compute_dtype = wfc.dtype
    cbytes = jnp.dtype(compute_dtype).itemsize
    obytes = jnp.dtype(x.dtype).itemsize

    # --- Row tile (M axis): large to feed the MXU, 128-aligned, but prefer
    # >= 2 M-blocks so the "parallel" axis can shard across v7x's two TCs.
    if tm is None:
        tm = 512
        while tm > 128 and _round_up(M, tm) // tm < 2:
            tm //= 2
        if M <= tm:
            tm = _round_up(M, 16)  # small-M case: one padded block
    M_pad = _round_up(M, tm)

    # --- Hidden (reduction) tile: as large as the VMEM budget allows.
    if th is None:
        th = _largest_divisor_tile(H, 1024, 128)
        while th > 128:
            vmem_est = (tm * E * cbytes * 2        # x tile (double-buffered)
                        + E * th * cbytes * 2      # Wfc tile
                        + th * E * cbytes * 2      # Wproj tile
                        + tm * E * obytes * 2      # out tile
                        + tm * E * 4               # f32 accumulator
                        + (th + E) * 4 * 2)        # biases
            if vmem_est <= vmem_budget_bytes and H % th == 0:
                break
            th = _largest_divisor_tile(H, max(th // 2, 128), 128)
    assert M_pad % tm == 0 and H % th == 0, (M_pad, tm, H, th)

    xs = x.reshape(M, E).astype(compute_dtype)
    if M_pad != M:
        xs = jnp.pad(xs, ((0, M_pad - M), (0, 0)))

    grid = (M_pad // tm, H // th)

    out = pl.pallas_call(
        _mlp_kernel,
        out_shape=jax.ShapeDtypeStruct((M_pad, E), x.dtype),
        grid_spec=pltpu.PrefetchScalarGridSpec(
            num_scalar_prefetch=0,
            grid=grid,
            in_specs=[
                pl.BlockSpec((tm, E), lambda i, h: (i, 0)),   # x rows
                pl.BlockSpec((E, th), lambda i, h: (0, h)),   # Wfc hidden tile
                pl.BlockSpec((1, th), lambda i, h: (0, h)),   # bfc hidden tile
                pl.BlockSpec((th, E), lambda i, h: (h, 0)),   # Wproj hidden tile
                pl.BlockSpec((1, E), lambda i, h: (0, 0)),    # bproj
            ],
            out_specs=pl.BlockSpec((tm, E), lambda i, h: (i, 0)),
            scratch_shapes=[pltpu.VMEM((tm, E), jnp.float32)],
        ),
        compiler_params=pltpu.CompilerParams(
            dimension_semantics=("parallel", "arbitrary"),
            # Safe on all gens: > v5e's 16 MiB default scoped limit,
            # < v7x's 64 MiB physical VMEM.
            vmem_limit_bytes=48 * 1024 * 1024),
    )(xs, wfc, bfc, wproj, bproj)

    if M_pad != M:
        out = out[:M]
    return out.reshape(orig_shape)


def init_params(key, n_embd):
    """Deterministic init matching nn.Linear default (uniform(-1/sqrt(fan_in)))."""
    E = n_embd
    H = 4 * E
    k1, k2, k3, k4 = jax.random.split(key, 4)
    lim_fc = 1.0 / math.sqrt(E)
    lim_proj = 1.0 / math.sqrt(H)
    c_fc_weight = jax.random.uniform(k1, (H, E), jnp.float32, -lim_fc, lim_fc)
    c_fc_bias = jax.random.uniform(k2, (H,), jnp.float32, -lim_fc, lim_fc)
    c_proj_weight = jax.random.uniform(k3, (E, H), jnp.float32, -lim_proj, lim_proj)
    c_proj_bias = jax.random.uniform(k4, (E,), jnp.float32, -lim_proj, lim_proj)
    return c_fc_weight, c_fc_bias, c_proj_weight, c_proj_bias


if __name__ == "__main__":
    key = jax.random.PRNGKey(0)
    kx, kp = jax.random.split(key)

    # Small shapes consistent with the module: x is [B, T, n_embd].
    B, T, E = 2, 8, 64          # hidden H = 4*E = 256
    x = jax.random.normal(kx, (B, T, E), jnp.float32)
    w_fc, b_fc, w_proj, b_proj = init_params(kp, E)

    # Plain-JAX f32 reference (same math as the PyTorch MLP forward).
    h = x @ w_fc.T + b_fc
    g = 0.5 * h * (1.0 + jnp.tanh(_SQRT_2_OVER_PI * (h + 0.044715 * h ** 3)))
    ref = g @ w_proj.T + b_proj

    # 1) f32 compute path: bit-tight check against the reference.
    params_f32 = prepare_mlp_params(w_fc, b_fc, w_proj, b_proj,
                                    compute_dtype=jnp.float32)
    out_f32 = mlp_forward(x, *params_f32)
    jax.block_until_ready(out_f32)
    assert out_f32.shape == x.shape
    assert jnp.allclose(out_f32, ref, atol=1e-4, rtol=1e-4), "f32 path mismatch"

    # 2) Default fast path: bf16 MXU inputs, f32 accumulation (expected small
    #    quantization error vs the f32 reference).
    params_bf16 = prepare_mlp_params(w_fc, b_fc, w_proj, b_proj,
                                     compute_dtype=jnp.bfloat16)
    out_bf16 = mlp_forward(x, *params_bf16)
    jax.block_until_ready(out_bf16)
    assert out_bf16.shape == x.shape
    assert jnp.allclose(out_bf16, ref, atol=3e-2, rtol=3e-2), "bf16 path mismatch"

    # TODO(synk): the surrounding config's mlp_dropout is not part of this
    # module's forward and is intentionally not modeled.
    print("KERNEL_OK")
</pallas_src>

<mosaic_0001>
module attributes {stable_mosaic.version = 11 : i64} {
  func.func @_mlp_kernel(%arg0: i32, %arg1: i32, %arg2: memref<16x64xf32, #tpu.memory_space<vmem>>, %arg3: memref<64x256xf32, #tpu.memory_space<vmem>>, %arg4: memref<1x256xf32, #tpu.memory_space<vmem>>, %arg5: memref<256x64xf32, #tpu.memory_space<vmem>>, %arg6: memref<1x64xf32, #tpu.memory_space<vmem>>, %arg7: memref<16x64xf32, #tpu.memory_space<vmem>>, %arg8: memref<16x64xf32, #tpu.memory_space<vmem>>) attributes {dimension_semantics = [#tpu.dimension_semantics<parallel>, #tpu.dimension_semantics<arbitrary>], iteration_bounds = array<i64: 1, 1>, scalar_prefetch = 0 : i64, scratch_operands = 1 : i64, tpu.core_type = #tpu.core_type<tc>, window_params = [{transform_indices = @transform_0, window_bounds = array<i64: 16, 64>}, {transform_indices = @transform_1, window_bounds = array<i64: 64, 256>}, {transform_indices = @transform_2, window_bounds = array<i64: 1, 256>}, {transform_indices = @transform_3, window_bounds = array<i64: 256, 64>}, {pipeline_mode = #tpu.pipeline_mode<synchronous>, transform_indices = @transform_4, window_bounds = array<i64: 1, 64>}, {transform_indices = @transform_5, window_bounds = array<i64: 16, 64>}]} {
    %c0_i32 = arith.constant 0 : i32
    %0 = arith.cmpi eq, %arg1, %c0_i32 : i32
    %1 = arith.extui %0 : i1 to i32
    %c0_i32_0 = arith.constant 0 : i32
    %2 = arith.cmpi ne, %1, %c0_i32_0 : i32
    scf.if %2 {
      %cst_19 = arith.constant 0.000000e+00 : f32
      %30 = vector.broadcast %cst_19 : f32 to vector<16x64xf32>
      %c0_20 = arith.constant 0 : index
      %c0_21 = arith.constant 0 : index
      %31 = vector.load %arg8[%c0_20, %c0_21] : memref<16x64xf32, #tpu.memory_space<vmem>>, vector<16x64xf32>
      tpu.vector_store %arg8[%c0_20, %c0_21], %30 {strides = array<i32>} : memref<16x64xf32, #tpu.memory_space<vmem>>, vector<16x64xf32>,
    } else {
    }
    %c0 = arith.constant 0 : index
    %c0_1 = arith.constant 0 : index
    %3 = vector.load %arg2[%c0, %c0_1] : memref<16x64xf32, #tpu.memory_space<vmem>>, vector<16x64xf32>
    %c0_2 = arith.constant 0 : index
    %c0_3 = arith.constant 0 : index
    %4 = vector.load %arg3[%c0_2, %c0_3] : memref<64x256xf32, #tpu.memory_space<vmem>>, vector<64x256xf32>
    %cst = arith.constant dense<0.000000e+00> : vector<16x256xf32>
    %5 = tpu.matmul %3, %4, %cst {dimension_numbers = #tpu.dot_dimension_numbers<[1], [0], [0], [1], [0, 0, 1, 1], [], []>} : vector<16x64xf32>, vector<64x256xf32>, vector<16x256xf32> -> vector<16x256xf32>
    %c0_4 = arith.constant 0 : index
    %c0_5 = arith.constant 0 : index
    %6 = vector.load %arg4[%c0_4, %c0_5] : memref<1x256xf32, #tpu.memory_space<vmem>>, vector<1x256xf32>
    %7 = vector.broadcast %6 : vector<1x256xf32> to vector<16x256xf32>
    %8 = arith.addf %5, %7 : vector<16x256xf32>
    %cst_6 = arith.constant 5.000000e-01 : f32
    %9 = vector.broadcast %cst_6 : f32 to vector<16x256xf32>
    %10 = arith.mulf %9, %8 : vector<16x256xf32>
    %cst_7 = arith.constant 4.471500e-02 : f32
    %11 = vector.broadcast %cst_7 : f32 to vector<16x256xf32>
    %12 = arith.mulf %11, %8 : vector<16x256xf32>
    %13 = arith.mulf %12, %8 : vector<16x256xf32>
    %14 = arith.mulf %13, %8 : vector<16x256xf32>
    %15 = arith.addf %8, %14 : vector<16x256xf32>
    %cst_8 = arith.constant 0.797884583 : f32
    %16 = vector.broadcast %cst_8 : f32 to vector<16x256xf32>
    %17 = arith.mulf %16, %15 : vector<16x256xf32>
    %18 = math.tanh %17 : vector<16x256xf32>
    %cst_9 = arith.constant 1.000000e+00 : f32
    %19 = vector.broadcast %cst_9 : f32 to vector<16x256xf32>
    %20 = arith.addf %19, %18 : vector<16x256xf32>
    %21 = arith.mulf %10, %20 : vector<16x256xf32>
    %c0_10 = arith.constant 0 : index
    %c0_11 = arith.constant 0 : index
    %22 = vector.load %arg8[%c0_10, %c0_11] : memref<16x64xf32, #tpu.memory_space<vmem>>, vector<16x64xf32>
    %c0_12 = arith.constant 0 : index
    %c0_13 = arith.constant 0 : index
    %23 = vector.load %arg5[%c0_12, %c0_13] : memref<256x64xf32, #tpu.memory_space<vmem>>, vector<256x64xf32>
    %cst_14 = arith.constant dense<0.000000e+00> : vector<16x64xf32>
    %24 = tpu.matmul %21, %23, %cst_14 {dimension_numbers = #tpu.dot_dimension_numbers<[1], [0], [0], [1], [0, 0, 1, 1], [], []>} : vector<16x256xf32>, vector<256x64xf32>, vector<16x64xf32> -> vector<16x64xf32>
    %25 = arith.addf %22, %24 : vector<16x64xf32>
    %c0_15 = arith.constant 0 : index
    %c0_16 = arith.constant 0 : index
    %26 = vector.load %arg8[%c0_15, %c0_16] : memref<16x64xf32, #tpu.memory_space<vmem>>, vector<16x64xf32>
    tpu.vector_store %arg8[%c0_15, %c0_16], %25 {strides = array<i32>} : memref<16x64xf32, #tpu.memory_space<vmem>>, vector<16x64xf32>,
    %c0_i32_17 = arith.constant 0 : i32
    %27 = arith.cmpi eq, %arg1, %c0_i32_17 : i32
    %28 = arith.extui %27 : i1 to i32
    %c0_i32_18 = arith.constant 0 : i32
    %29 = arith.cmpi ne, %28, %c0_i32_18 : i32
    scf.if %29 {
      %c0_19 = arith.constant 0 : index
      %c0_20 = arith.constant 0 : index
      %30 = vector.load %arg8[%c0_19, %c0_20] : memref<16x64xf32, #tpu.memory_space<vmem>>, vector<16x64xf32>
      %c0_21 = arith.constant 0 : index
      %c0_22 = arith.constant 0 : index
      %31 = vector.load %arg6[%c0_21, %c0_22] : memref<1x64xf32, #tpu.memory_space<vmem>>, vector<1x64xf32>
      %32 = vector.broadcast %31 : vector<1x64xf32> to vector<16x64xf32>
      %33 = arith.addf %30, %32 : vector<16x64xf32>
      %c0_23 = arith.constant 0 : index
      %c0_24 = arith.constant 0 : index
      %34 = vector.load %arg7[%c0_23, %c0_24] : memref<16x64xf32, #tpu.memory_space<vmem>>, vector<16x64xf32>
      tpu.vector_store %arg7[%c0_23, %c0_24], %33 {strides = array<i32>} : memref<16x64xf32, #tpu.memory_space<vmem>>, vector<16x64xf32>,
    } else {
    }
    return
  }
  func.func @transform_0(%arg0: i32, %arg1: i32) -> (i32, i32) {
    %c0_i32 = arith.constant 0 : i32
    %c0_i32_0 = arith.constant 0 : i32
    return %arg0, %c0_i32 : i32, i32
  }
  func.func @transform_1(%arg0: i32, %arg1: i32) -> (i32, i32) {
    %c0_i32 = arith.constant 0 : i32
    %c0_i32_0 = arith.constant 0 : i32
    return %c0_i32, %arg1 : i32, i32
  }
  func.func @transform_2(%arg0: i32, %arg1: i32) -> (i32, i32) {
    %c0_i32 = arith.constant 0 : i32
    %c0_i32_0 = arith.constant 0 : i32
    return %c0_i32, %arg1 : i32, i32
  }
  func.func @transform_3(%arg0: i32, %arg1: i32) -> (i32, i32) {
    %c0_i32 = arith.constant 0 : i32
    %c0_i32_0 = arith.constant 0 : i32
    return %arg1, %c0_i32 : i32, i32
  }
  func.func @transform_4(%arg0: i32, %arg1: i32) -> (i32, i32) {
    %c0_i32 = arith.constant 0 : i32
    %c0_i32_0 = arith.constant 0 : i32
    %c0_i32_1 = arith.constant 0 : i32
    return %c0_i32, %c0_i32_0 : i32, i32
  }
  func.func @transform_5(%arg0: i32, %arg1: i32) -> (i32, i32) {
    %c0_i32 = arith.constant 0 : i32
    %c0_i32_0 = arith.constant 0 : i32
    return %arg0, %c0_i32 : i32, i32
  }
}

</mosaic_0001>

<llo_original>
// kernel: tpu_custom_call.1
$region0: #{tpu_custom_call.1}
  #allocation0 [shape = 'u32[]', space=smem, size = 0x4, offset = 0x4, fixed_abs, tag = 'smem constant byte address 0x4 - core index']
  #allocation1 [shape = 'u32[72,128]{1,0:T(1,128)}', space=vmem, size = 0x9000, scoped, tag = 'internal scratch']
  #allocation2 [shape = 'f32[16,64]{1,0:T(8,128)}', space=vmem, size = 0x2000, scoped, tag = 'scratch operand']
  %s0 = inlined_call_operand.vmem [shape: f32[16,64], index: 0, kind: input, shape index: {}]
  %s1 = inlined_call_operand.vmem [shape: f32[64,256], index: 1, kind: input, shape index: {}]
  %s2 = inlined_call_operand.vmem [shape: f32[1,256], index: 2, kind: input, shape index: {}]
  %s3 = inlined_call_operand.vmem [shape: f32[256,64], index: 3, kind: input, shape index: {}]
  %s4 = inlined_call_operand.vmem [shape: f32[1,64], index: 4, kind: input, shape index: {}]
  %s5 = inlined_call_operand.hbm [shape: f32[16,64], index: 5, kind: output, shape index: {}]
  %s6 = sld [smem:[#allocation0]]
  $region38: #{tpu_custom_call.1} parent=0
    _
  %s8 = ssub.s32 1, %s6
  %s9 = scalar_select 0, %s8, %s6
  $region1: #{tpu_custom_call.1} parent=0
    #allocation3 [shape = 'u8[8192]{0}', space=vmem, size = 0x2000, scoped, tag = 'output window, operand 0, single buffered']
    #allocation4 [shape = 's32[1]{0}', space=sflag, size = 0x4, scoped, tag = 'scoped memory for tpu_custom_call.1']
    %10 = vsyncpa [#allocation4], 0
    // Predicated region
    $region2: #{tpu_custom_call.1} parent=1 // pred_check
      _
    $region3: #{tpu_custom_call.1} parent=1 // pred_check_branch
      %12 = sbr.rel (0) target = $region5
    $region4: #{tpu_custom_call.1} parent=1 // pred_region
      _
    $region5: #{tpu_custom_call.1} parent=1 // pred_fallthru
      _
    // Predicated region
    $region6: #{tpu_custom_call.1} parent=1 // pred_check
      _
    $region7: #{tpu_custom_call.1} parent=1 // pred_check_branch
      %14 = sbr.rel (0) target = $region9
    $region8: #{tpu_custom_call.1} parent=1 // pred_region
      _
    $region9: #{tpu_custom_call.1} parent=1 // pred_fallthru
      _
    // Predicated region
    $region10: #{tpu_custom_call.1} parent=1 // pred_check
      _
    $region11: #{tpu_custom_call.1} parent=1 // pred_check_branch
      %16 = sbr.rel (0) target = $region13
    $region12: #{tpu_custom_call.1} parent=1 // pred_region
      _
    $region13: #{tpu_custom_call.1} parent=1 // pred_fallthru
      _
    // Predicated region
    $region14: #{tpu_custom_call.1} parent=1 // pred_check
      _
    $region15: #{tpu_custom_call.1} parent=1 // pred_check_branch
      %18 = sbr.rel (0) target = $region17
    $region16: #{tpu_custom_call.1} parent=1 // pred_region
      _
    $region17: #{tpu_custom_call.1} parent=1 // pred_fallthru
      _
    // Predicated region
    $region18: #{tpu_custom_call.1} parent=1 // pred_check
      _
    $region19: #{tpu_custom_call.1} parent=1 // pred_check_branch
      %20 = sbr.rel (0) target = $region21
    $region20: #{tpu_custom_call.1} parent=1 // pred_region
      _
    $region21: #{tpu_custom_call.1} parent=1 // pred_fallthru
      _
    %p21 = scmp.eq.s32.totalorder 0, 0
    // Predicated region
    $region22: #{tpu_custom_call.1} parent=1 // pred_check
      %p22 = pneg %p21
    $region23: #{tpu_custom_call.1} parent=1 // pred_check_branch
      %24 = sbr.rel (%p22) target = $region25
    $region24: #{tpu_custom_call.1} parent=1 // pred_region
      %vm25 = vcmask 523264
      %26 = vst.msk [vmem:[#allocation2] sm:$0xff] %vm25, 0.0
      %27 = vst.msk [vmem:[#allocation2 + $0x8] sm:$0xff] %vm25, 0.0
    $region25: #{tpu_custom_call.1} parent=1 // pred_fallthru
      _
    %v28 = vld [vmem:[%s0] sm:$0xff]
    %v29 = vld [vmem:[%s0 + $0x8] sm:$0xff]
    %v30 = vld [vmem:[%s1] sm:$0xff]
    %v31 = vld [vmem:[%s1 + $0x8] sm:$0xff]
    %v32 = vld [vmem:[%s1 + $0x10] sm:$0xff]
    %v33 = vld [vmem:[%s1 + $0x18] sm:$0xff]
    %v34 = vld [vmem:[%s1 + $0x20] sm:$0xff]
    %v35 = vld [vmem:[%s1 + $0x28] sm:$0xff]
    %v36 = vld [vmem:[%s1 + $0x30] sm:$0xff]
    %v37 = vld [vmem:[%s1 + $0x38] sm:$0xff]
    %v38 = vld [vmem:[%s1 + $0x40] sm:$0xff]
    %v39 = vld [vmem:[%s1 + $0x48] sm:$0xff]
    %v40 = vld [vmem:[%s1 + $0x50] sm:$0xff]
    %v41 = vld [vmem:[%s1 + $0x58] sm:$0xff]
    %v42 = vld [vmem:[%s1 + $0x60] sm:$0xff]
    %v43 = vld [vmem:[%s1 + $0x68] sm:$0xff]
    %v44 = vld [vmem:[%s1 + $0x70] sm:$0xff]
    %v45 = vld [vmem:[%s1 + $0x78] sm:$0xff]
    %v46 = vld [vmem:[%s2] sm:$0x3]
    %v48 = vperm.slane %v46, 0
    %v49 = vperm.slane %v46, 1
    %vm52 = vcmask 523264
    %v54 = vsel %vm52, %v28, 0
    %v57 = vsel %vm52, %v29, 0
    %59 = vmatpush.msra.mxu0 0.0
    %60 = vmatpush.msra.mxu0 0.0
    %61 = vmatpush.msra.mxu0 0.0
    %62 = vmatpush.msra.mxu0 0.0
    %63 = vmatpush.msra.mxu0 0.0
    %64 = vmatpush.msra.mxu0 0.0
    %65 = vmatpush.msra.mxu0 0.0
    %66 = vmatpush.msra.mxu0 0.0
    %67 = vmatpush.msra.mxu0 %v44
    %68 = vmatpush.msra.mxu0 %v42
    %69 = vmatpush.msra.mxu0 %v40
    %70 = vmatpush.msra.mxu0 %v38
    %71 = vmatpush.msra.mxu0 %v36
    %72 = vmatpush.msra.mxu0 %v34
    %73 = vmatpush.msra.mxu0 %v32
    %74 = vmatpush.msra.mxu0 %v30
    %75 = vmatmul.f32.gmra.mxu0 %v54
    %v76 = vpop.f32.mrf.mxu0
    %v77 = vadd.f32 %v48, %v76
    %78 = vmatmul.f32.gmra.mxu0 %v57
    %v79 = vpop.f32.mrf.mxu0
    %v80 = vadd.f32 %v48, %v79
    %81 = vdwg.mxu0
    %82 = vmatpush.msra.mxu0 0.0
    %83 = vmatpush.msra.mxu0 0.0
    %84 = vmatpush.msra.mxu0 0.0
    %85 = vmatpush.msra.mxu0 0.0
    %86 = vmatpush.msra.mxu0 0.0
    %87 = vmatpush.msra.mxu0 0.0
    %88 = vmatpush.msra.mxu0 0.0
    %89 = vmatpush.msra.mxu0 0.0
    %90 = vmatpush.msra.mxu0 %v45
    %91 = vmatpush.msra.mxu0 %v43
    %92 = vmatpush.msra.mxu0 %v41
    %93 = vmatpush.msra.mxu0 %v39
    %94 = vmatpush.msra.mxu0 %v37
    %95 = vmatpush.msra.mxu0 %v35
    %96 = vmatpush.msra.mxu0 %v33
    %97 = vmatpush.msra.mxu0 %v31
    %98 = vmatmul.f32.gmra.mxu0 %v54
    %v99 = vpop.f32.mrf.mxu0
    %v100 = vadd.f32 %v49, %v99
    %101 = vmatmul.f32.gmra.mxu0 %v57
    %v102 = vpop.f32.mrf.mxu0
    %v103 = vadd.f32 %v49, %v102
    %104 = vdwg.mxu0
    %v105 = vmul.f32 %v77, 0.5
    %v106 = vmul.f32 %v100, 0.5
    %v107 = vmul.f32 %v80, 0.5
    %v108 = vmul.f32 %v103, 0.5
    %v109 = vmul.f32 %v77, 0.044715
    %v110 = vmul.f32 %v100, 0.044715
    %v111 = vmul.f32 %v80, 0.044715
    %v112 = vmul.f32 %v103, 0.044715
    %v113 = vmul.f32 %v109, %v77
    %v114 = vmul.f32 %v110, %v100
    %v115 = vmul.f32 %v111, %v80
    %v116 = vmul.f32 %v112, %v103
    %v117 = vmul.f32 %v113, %v77
    %v118 = vmul.f32 %v114, %v100
    %v119 = vmul.f32 %v115, %v80
    %v120 = vmul.f32 %v116, %v103
    %v121 = vadd.f32 %v77, %v117
    %v122 = vadd.f32 %v100, %v118
    %v123 = vadd.f32 %v80, %v119
    %v124 = vadd.f32 %v103, %v120
    %v125 = vmul.f32 %v121, 0.7978846
    %v126 = vmul.f32 %v122, 0.7978846
    %v127 = vmul.f32 %v123, 0.7978846
    %v128 = vmul.f32 %v124, 0.7978846
    %v129 = vtanh.pop %v125
    %v130 = vtanh.pop %v126
    %v131 = vtanh.pop %v127
    %v132 = vtanh.pop %v128
    %v133 = vadd.f32 %v129, 1.0
    %v134 = vadd.f32 %v130, 1.0
    %v135 = vadd.f32 %v131, 1.0
    %v136 = vadd.f32 %v132, 1.0
    %v137 = vmul.f32 %v105, %v133
    %v138 = vmul.f32 %v106, %v134
    %v139 = vmul.f32 %v107, %v135
    %v140 = vmul.f32 %v108, %v136
    %v141 = vld [vmem:[#allocation2] sm:$0xff]
    %v142 = vld [vmem:[#allocation2 + $0x8] sm:$0xff]
    %v143 = vld [vmem:[%s3] sm:$0xff]
    %v144 = vld [vmem:[%s3 + $0x8] sm:$0xff]
    %v145 = vld [vmem:[%s3 + $0x10] sm:$0xff]
    %v146 = vld [vmem:[%s3 + $0x18] sm:$0xff]
    %v147 = vld [vmem:[%s3 + $0x20] sm:$0xff]
    %v148 = vld [vmem:[%s3 + $0x28] sm:$0xff]
    %v149 = vld [vmem:[%s3 + $0x30] sm:$0xff]
    %v150 = vld [vmem:[%s3 + $0x38] sm:$0xff]
    %v151 = vld [vmem:[%s3 + $0x40] sm:$0xff]
    %v152 = vld [vmem:[%s3 + $0x48] sm:$0xff]
    %v153 = vld [vmem:[%s3 + $0x50] sm:$0xff]
    %v154 = vld [vmem:[%s3 + $0x58] sm:$0xff]
    %v155 = vld [vmem:[%s3 + $0x60] sm:$0xff]
    %v156 = vld [vmem:[%s3 + $0x68] sm:$0xff]
    %v157 = vld [vmem:[%s3 + $0x70] sm:$0xff]
    %v158 = vld [vmem:[%s3 + $0x78] sm:$0xff]
    %v159 = vld [vmem:[%s3 + $0x80] sm:$0xff]
    %v160 = vld [vmem:[%s3 + $0x88] sm:$0xff]
    %v161 = vld [vmem:[%s3 + $0x90] sm:$0xff]
    %v162 = vld [vmem:[%s3 + $0x98] sm:$0xff]
    %v163 = vld [vmem:[%s3 + $0xa0] sm:$0xff]
    %v164 = vld [vmem:[%s3 + $0xa8] sm:$0xff]
    %v165 = vld [vmem:[%s3 + $0xb0] sm:$0xff]
    %v166 = vld [vmem:[%s3 + $0xb8] sm:$0xff]
    %v167 = vld [vmem:[%s3 + $0xc0] sm:$0xff]
    %v168 = vld [vmem:[%s3 + $0xc8] sm:$0xff]
    %v169 = vld [vmem:[%s3 + $0xd0] sm:$0xff]
    %v170 = vld [vmem:[%s3 + $0xd8] sm:$0xff]
    %v171 = vld [vmem:[%s3 + $0xe0] sm:$0xff]
    %v172 = vld [vmem:[%s3 + $0xe8] sm:$0xff]
    %v173 = vld [vmem:[%s3 + $0xf0] sm:$0xff]
    %v174 = vld [vmem:[%s3 + $0xf8] sm:$0xff]
    %175 = vmatpush.msra.mxu0 %v158
    %176 = vmatpush.msra.mxu0 %v157
    %177 = vmatpush.msra.mxu0 %v156
    %178 = vmatpush.msra.mxu0 %v155
    %179 = vmatpush.msra.mxu0 %v154
    %180 = vmatpush.msra.mxu0 %v153
    %181 = vmatpush.msra.mxu0 %v152
    %182 = vmatpush.msra.mxu0 %v151
    %183 = vmatpush.msra.mxu0 %v150
    %184 = vmatpush.msra.mxu0 %v149
    %185 = vmatpush.msra.mxu0 %v148
    %186 = vmatpush.msra.mxu0 %v147
    %187 = vmatpush.msra.mxu0 %v146
    %188 = vmatpush.msra.mxu0 %v145
    %189 = vmatpush.msra.mxu0 %v144
    %190 = vmatpush.msra.mxu0 %v143
    %191 = vmatmul.f32.gmra.mxu0 %v137
    %v192 = vpop.f32.mrf.mxu0
    %v193 = vadd.f32 0.0, %v192
    %194 = vmatmul.f32.gmra.mxu0 %v139
    %v195 = vpop.f32.mrf.mxu0
    %v196 = vadd.f32 0.0, %v195
    %197 = vdwg.mxu0
    %198 = vmatpush.msra.mxu0 %v174
    %199 = vmatpush.msra.mxu0 %v173
    %200 = vmatpush.msra.mxu0 %v172
    %201 = vmatpush.msra.mxu0 %v171
    %202 = vmatpush.msra.mxu0 %v170
    %203 = vmatpush.msra.mxu0 %v169
    %204 = vmatpush.msra.mxu0 %v168
    %205 = vmatpush.msra.mxu0 %v167
    %206 = vmatpush.msra.mxu0 %v166
    %207 = vmatpush.msra.mxu0 %v165
    %208 = vmatpush.msra.mxu0 %v164
    %209 = vmatpush.msra.mxu0 %v163
    %210 = vmatpush.msra.mxu0 %v162
    %211 = vmatpush.msra.mxu0 %v161
    %212 = vmatpush.msra.mxu0 %v160
    %213 = vmatpush.msra.mxu0 %v159
    %214 = vmatmul.f32.gmra.mxu0 %v138
    %v215 = vpop.f32.mrf.mxu0
    %v216 = vadd.f32 %v193, %v215
    %217 = vmatmul.f32.gmra.mxu0 %v140
    %v218 = vpop.f32.mrf.mxu0
    %v219 = vadd.f32 %v196, %v218
    %220 = vdwg.mxu0
    %v221 = vadd.f32 %v141, %v216
    %v222 = vadd.f32 %v142, %v219
    %223 = vst.msk [vmem:[#allocation2] sm:$0xff] %vm52, %v221
    %224 = vst.msk [vmem:[#allocation2 + $0x8] sm:$0xff] %vm52, %v222
    // Predicated region
    $region26: #{tpu_custom_call.1} parent=1 // pred_check
      %p225 = pneg %p21
    $region27: #{tpu_custom_call.1} parent=1 // pred_check_branch
      %227 = sbr.rel (%p225) target = $region29
    $region28: #{tpu_custom_call.1} parent=1 // pred_region
      %v228 = vld [vmem:[#allocation2] sm:$0xff]
      %v229 = vld [vmem:[#allocation2 + $0x8] sm:$0xff]
      %v230 = vld [vmem:[%s4] sm:$0x1]
      %v232 = vperm.slane %v230, 0
      %v234 = vadd.f32 %v228, %v232
      %v235 = vadd.f32 %v229, %v232
      %236 = vst.msk [vmem:[#allocation3] sm:$0xff] %vm52, %v234
      %237 = vst.msk [vmem:[#allocation3 + $0x8] sm:$0xff] %vm52, %v235
    $region29: #{tpu_custom_call.1} parent=1 // pred_fallthru
      _
    // Predicated region
    $region30: #{tpu_custom_call.1} parent=1 // pred_check
      _
    $region31: #{tpu_custom_call.1} parent=1 // pred_check_branch
      %239 = sbr.rel (0) target = $region33
    $region32: #{tpu_custom_call.1} parent=1 // pred_region
      %241 = vsyncadd [#allocation4], 0
      %s242 = sshll.u32 [#allocation3], 4
      %s243 = int_to_ptr.vmem [resolvable:$true] %s242
      %s244 = sshll.u32 %s5, 4
      %s245 = int_to_ptr.hbm [resolvable:$true] %s244
      %250 = dma.vmem_to_hbm [thread:$0]  %s243, 256, %s245, [#allocation4], 128, 128, 8
    $region33: #{tpu_custom_call.1} parent=1 // pred_fallthru
      _
    // Predicated region
    $region34: #{tpu_custom_call.1} parent=1 // pred_check
      _
    $region35: #{tpu_custom_call.1} parent=1 // pred_check_branch
      %252 = sbr.rel (0) target = $region37
    $region36: #{tpu_custom_call.1} parent=1 // pred_region
      %254 = dma.done [#allocation4], 256
    $region37: #{tpu_custom_call.1} parent=1 // pred_fallthru
      _
    %255 = vsyncpa [#allocation4], 1

</llo_original>
